<compile_context>
chip_gen: v7x
topology: tpu7x:2x2x1
jax: 0.10.0
libtpu: 0.0.40
codegen_flags: <defaults>
</compile_context>

<pallas_src>
from functools import partial

import jax
import jax.numpy as jnp
from jax.experimental import pallas as pl
from jax.experimental.pallas import tpu as pltpu


def _gmof_kernel(x_ref, o_ref, *, rho2):
    # Compute in f32 regardless of input dtype; cast back on store.
    x = x_ref[...].astype(jnp.float32)
    sq = x * x
    o_ref[...] = (sq / (sq + rho2)).astype(o_ref.dtype)


def gmof_unscaled(residual: jax.Array, rho: float = 1.0) -> jax.Array:
    """Elementwise Geman-McClure: x^2 / (x^2 + rho^2)."""
    orig_shape = residual.shape
    orig_dtype = residual.dtype
    rho2 = float(rho) ** 2  # trace-time constant closed over by the kernel

    LANES = 128
    SUBLANES = 8
    ALIGN = SUBLANES * LANES  # 1024 elements = one (8,128) f32 vreg tile

    n = residual.size
    if n == 0:
        return residual

    flat = residual.reshape(-1)

    # Pad only to an (8 x 128)-element boundary (tiny tail pad, not tile-sized).
    n_pad = pl.cdiv(n, ALIGN) * ALIGN
    padded = n_pad != n
    if padded:
        flat = jnp.concatenate(
            [flat, jnp.zeros((n_pad - n,), dtype=orig_dtype)], axis=0
        )

    rows = n_pad // LANES  # multiple of 8 by construction
    x2d = flat.reshape(rows, LANES)

    # 2048 x 128 f32 block = 1 MiB; ~4 MiB resident with double buffering.
    MAX_TILE_ROWS = 2048
    tile_rows = min(MAX_TILE_ROWS, rows)  # rows (and hence tile_rows) % 8 == 0
    grid = (pl.cdiv(rows, tile_rows),)  # ragged last block is masked by Pallas

    out2d = pl.pallas_call(
        partial(_gmof_kernel, rho2=rho2),
        out_shape=jax.ShapeDtypeStruct((rows, LANES), orig_dtype),
        grid_spec=pltpu.PrefetchScalarGridSpec(
            num_scalar_prefetch=0,
            grid=grid,
            in_specs=[pl.BlockSpec((tile_rows, LANES), lambda i: (i, 0))],
            out_specs=pl.BlockSpec((tile_rows, LANES), lambda i: (i, 0)),
        ),
        compiler_params=pltpu.CompilerParams(
            dimension_semantics=("parallel",)
        ),
    )(x2d)

    if padded:
        return out2d.reshape(-1)[:n].reshape(orig_shape)
    return out2d.reshape(orig_shape)


if __name__ == "__main__":
    key = jax.random.PRNGKey(0)
    k1, k2, k3 = jax.random.split(key, 3)

    def ref_fn(x, rho):
        sq = jnp.square(x.astype(jnp.float32))
        return (sq / (sq + float(rho) ** 2)).astype(x.dtype)

    # Case 1: small NCHW-ish residual tensor (2048 elems -> no pad, grid=(1,)).
    x1 = jax.random.normal(k1, (2, 4, 16, 16), dtype=jnp.float32)
    o1 = jax.block_until_ready(gmof_unscaled(x1, rho=1.0))
    assert o1.shape == x1.shape and o1.dtype == x1.dtype
    assert jnp.allclose(o1, ref_fn(x1, 1.0), atol=1e-6, rtol=1e-6)

    # Case 2: larger tensor -> multi-step grid with a ragged trailing block
    # (rows = 2560, tile_rows = 2048, grid = (2,)).
    x2 = jax.random.normal(k2, (4, 16, 64, 80), dtype=jnp.float32)
    o2 = jax.block_until_ready(gmof_unscaled(x2, rho=0.5))
    assert o2.shape == x2.shape and o2.dtype == x2.dtype
    assert jnp.allclose(o2, ref_fn(x2, 0.5), atol=1e-6, rtol=1e-6)

    # Case 3: odd size that needs the small 8x128 alignment pad.
    x3 = jax.random.normal(k3, (3, 7, 11), dtype=jnp.float32)
    o3 = jax.block_until_ready(gmof_unscaled(x3, rho=2.0))
    assert o3.shape == x3.shape and o3.dtype == x3.dtype
    assert jnp.allclose(o3, ref_fn(x3, 2.0), atol=1e-6, rtol=1e-6)

    print("KERNEL_OK")
</pallas_src>

<mosaic_0001>
module attributes {stable_mosaic.version = 11 : i64} {
  func.func @_gmof_kernel(%arg0: i32, %arg1: memref<16x128xf32, #tpu.memory_space<vmem>>, %arg2: memref<16x128xf32, #tpu.memory_space<vmem>>) attributes {dimension_semantics = [#tpu.dimension_semantics<parallel>], iteration_bounds = array<i64: 1>, scalar_prefetch = 0 : i64, scratch_operands = 0 : i64, tpu.core_type = #tpu.core_type<tc>, window_params = [{transform_indices = @transform_0, window_bounds = array<i64: 16, 128>}, {transform_indices = @transform_1, window_bounds = array<i64: 16, 128>}]} {
    %c0 = arith.constant 0 : index
    %c0_0 = arith.constant 0 : index
    %0 = vector.load %arg1[%c0, %c0_0] : memref<16x128xf32, #tpu.memory_space<vmem>>, vector<16x128xf32>
    %1 = arith.mulf %0, %0 : vector<16x128xf32>
    %cst = arith.constant 1.000000e+00 : f32
    %2 = vector.broadcast %cst : f32 to vector<16x128xf32>
    %3 = arith.addf %1, %2 : vector<16x128xf32>
    %4 = arith.divf %1, %3 : vector<16x128xf32>
    %c0_1 = arith.constant 0 : index
    %c0_2 = arith.constant 0 : index
    %5 = vector.load %arg2[%c0_1, %c0_2] : memref<16x128xf32, #tpu.memory_space<vmem>>, vector<16x128xf32>
    tpu.vector_store %arg2[%c0_1, %c0_2], %4 {strides = array<i32>} : memref<16x128xf32, #tpu.memory_space<vmem>>, vector<16x128xf32>,
    return
  }
  func.func @transform_0(%arg0: i32) -> (i32, i32) {
    %c0_i32 = arith.constant 0 : i32
    %c0_i32_0 = arith.constant 0 : i32
    return %arg0, %c0_i32 : i32, i32
  }
  func.func @transform_1(%arg0: i32) -> (i32, i32) {
    %c0_i32 = arith.constant 0 : i32
    %c0_i32_0 = arith.constant 0 : i32
    return %arg0, %c0_i32 : i32, i32
  }
}

</mosaic_0001>

<llo_original>
// kernel: tpu_custom_call.1
$region0: #{tpu_custom_call.1}
  #allocation0 [shape = 'u32[]', space=smem, size = 0x4, offset = 0x4, fixed_abs, tag = 'smem constant byte address 0x4 - core index']
  #allocation1 [shape = 'u32[144,128]{1,0:T(1,128)}', space=vmem, size = 0x12000, scoped, tag = 'internal scratch']
  %s0 = inlined_call_operand.hbm [shape: f32[16,128], index: 0, kind: input, shape index: {}]
  %s1 = inlined_call_operand.hbm [shape: f32[16,128], index: 1, kind: output, shape index: {}]
  %s2 = sld [smem:[#allocation0]]
  $region18: #{tpu_custom_call.1} parent=0
    _
  %s4 = ssub.s32 1, %s2
  %s5 = scalar_select 0, %s4, %s2
  $region1: #{tpu_custom_call.1} parent=0
    #allocation2 [shape = 'u8[8192]{0}', space=vmem, size = 0x2000, scoped, tag = 'input window, operand 0, single buffered']
    #allocation3 [shape = 's32[1]{0}', space=sflag, size = 0x4, scoped, tag = 'scoped memory for tpu_custom_call.1']
    #allocation4 [shape = 's32[1]{0}', space=sflag, size = 0x4, scoped, tag = 'scoped memory for tpu_custom_call.1']
    #allocation5 [shape = 'u8[8192]{0}', space=vmem, size = 0x2000, scoped, tag = 'output window, operand 0, single buffered']
    %6 = vsyncpa [#allocation3], 0
    %7 = vsyncpa [#allocation4], 0
    // Predicated region
    $region2: #{tpu_custom_call.1} parent=1 // pred_check
      _
    $region3: #{tpu_custom_call.1} parent=1 // pred_check_branch
      %9 = sbr.rel (0) target = $region5
    $region4: #{tpu_custom_call.1} parent=1 // pred_region
      %s11 = ssub.s32 256, 256
      %12 = vsyncadd [#allocation3], %s11
      %s13 = sshll.u32 [#allocation2], 4
      %s14 = int_to_ptr.vmem [resolvable:$true] %s13
      %19 = dma.hbm_to_vmem [thread:$0]  %s0, 256, %s14, [#allocation3], 128, 128, 8
    $region5: #{tpu_custom_call.1} parent=1 // pred_fallthru
      _
    // Predicated region
    $region6: #{tpu_custom_call.1} parent=1 // pred_check
      _
    $region7: #{tpu_custom_call.1} parent=1 // pred_check_branch
      %21 = sbr.rel (0) target = $region9
    $region8: #{tpu_custom_call.1} parent=1 // pred_region
      %22 = dma.done [#allocation3], 256
    $region9: #{tpu_custom_call.1} parent=1 // pred_fallthru
      _
    %v23 = vld [vmem:[#allocation2] sm:$0xff]
    %v24 = vld [vmem:[#allocation2 + $0x8] sm:$0xff]
    %v25 = vmul.f32 %v23, %v23
    %v26 = vmul.f32 %v24, %v24
    %v27 = vadd.f32 %v25, 1.0
    %v28 = vadd.f32 %v26, 1.0
    %v29 = vrcp.pop %v27
    %v30 = vmul.f32 %v25, %v29
    %v31 = vrcp.pop %v28
    %v32 = vmul.f32 %v26, %v31
    %33 = vst [vmem:[#allocation5] sm:$0xff] %v30
    %34 = vst [vmem:[#allocation5 + $0x8] sm:$0xff] %v32
    // Predicated region
    $region10: #{tpu_custom_call.1} parent=1 // pred_check
      _
    $region11: #{tpu_custom_call.1} parent=1 // pred_check_branch
      %36 = sbr.rel (0) target = $region13
    $region12: #{tpu_custom_call.1} parent=1 // pred_region
      %s38 = ssub.s32 256, 256
      %39 = vsyncadd [#allocation4], %s38
      %s40 = sshll.u32 [#allocation5], 4
      %s41 = int_to_ptr.vmem [resolvable:$true] %s40
      %46 = dma.vmem_to_hbm [thread:$0]  %s41, 256, %s1, [#allocation4], 128, 128, 8
    $region13: #{tpu_custom_call.1} parent=1 // pred_fallthru
      _
    // Predicated region
    $region14: #{tpu_custom_call.1} parent=1 // pred_check
      _
    $region15: #{tpu_custom_call.1} parent=1 // pred_check_branch
      %48 = sbr.rel (0) target = $region17
    $region16: #{tpu_custom_call.1} parent=1 // pred_region
      %49 = dma.done [#allocation4], 256
    $region17: #{tpu_custom_call.1} parent=1 // pred_fallthru
      _
    %50 = vsyncpa [#allocation3], 1
    %51 = vsyncpa [#allocation4], 1

</llo_original>
